<compile_context>
chip_gen: v7x
topology: tpu7x:2x2x1
jax: 0.10.0
libtpu: 0.0.40
codegen_flags: <defaults>
</compile_context>

<pallas_src>
import functools

import jax
import jax.numpy as jnp
from jax import lax
from jax.experimental import pallas as pl
from jax.experimental.pallas import tpu as pltpu


def depthconv1d_kernel(x_ref, w1_ref, b1_ref, g1w_ref, g1b_ref,
                       wd_ref, bd_ref, g2w_ref, g2b_ref,
                       wo_ref, bo_ref, a1_ref, a2_ref,
                       res_ref, skip_ref,
                       hp_ref,
                       *, kernel, dilation, padding, eps, c_in):
    x = x_ref[0]                               # (C_in, T)
    T = x.shape[1]
    H = w1_ref.shape[0]
    T_out = T + 2 * padding - dilation * (kernel - 1)
    inv_n1 = 1.0 / float(H * T)
    inv_n2 = 1.0 / float(H * T_out)

    # ---- 1x1 conv (pointwise, MXU) -> PReLU ----
    h = jnp.dot(w1_ref[...], x, preferred_element_type=jnp.float32) + b1_ref[...]
    a1 = a1_ref[0]                             # PReLU scalar from SMEM
    h = jnp.where(h >= 0, h, a1 * h)

    # ---- GroupNorm(1, H) #1: single-pass stats, rsqrt folded into affine ----
    s1 = jnp.sum(h)
    s2 = jnp.sum(h * h)
    mean1 = s1 * inv_n1
    var1 = s2 * inv_n1 - mean1 * mean1
    inv1 = lax.rsqrt(var1 + eps)
    scale1 = inv1 * g1w_ref[...]               # (H, 1)
    shift1 = g1b_ref[...] - mean1 * scale1     # (H, 1)
    h = h * scale1 + shift1                    # one fma pass

    # ---- depthwise conv via zero-padded VMEM scratch (no concatenate temp) ----
    if padding > 0:
        hp_ref[:, :padding] = jnp.zeros((H, padding), jnp.float32)
        hp_ref[:, padding + T:] = jnp.zeros((H, padding), jnp.float32)
    hp_ref[:, padding:padding + T] = h

    acc = bd_ref[...] + wd_ref[:, 0:1] * hp_ref[:, 0:T_out]
    for k in range(1, kernel):
        off = k * dilation
        acc = acc + wd_ref[:, k:k + 1] * hp_ref[:, off:off + T_out]

    # ---- PReLU #2 ----
    a2 = a2_ref[0]
    acc = jnp.where(acc >= 0, acc, a2 * acc)

    # ---- GroupNorm #2: compute stats only; normalization is folded into the
    #      fused residual+skip output matmul below ----
    t1 = jnp.sum(acc)
    t2 = jnp.sum(acc * acc)
    mean2 = t1 * inv_n2
    var2 = t2 * inv_n2 - mean2 * mean2
    inv2 = lax.rsqrt(var2 + eps)
    scale2 = inv2 * g2w_ref[...]               # (1, H)
    shift2 = g2b_ref[...] - mean2 * scale2     # (1, H)

    # ---- fused residual + skip 1x1 conv, GN2 folded into weights/bias ----
    wo = wo_ref[...]                           # (2*C_in, H)
    wf = wo * scale2                           # fold per-channel GN scale
    bf = bo_ref[...] + jnp.sum(wo * shift2, axis=1, keepdims=True)  # (2*C_in, 1)
    out = jnp.dot(wf, acc, preferred_element_type=jnp.float32) + bf  # (2C, T_out)
    res_ref[0] = out[:c_in].astype(res_ref.dtype)
    skip_ref[0] = out[c_in:].astype(skip_ref.dtype)


def depth_conv1d(x, p, *, kernel, dilation, padding, eps=1e-8):
    B, C_in, T = x.shape
    H = p["w1"].shape[0]
    T_out = T + 2 * padding - dilation * (kernel - 1)

    # Fuse residual + skip pointwise convs into a single weight/bias.
    wo = jnp.concatenate([p["wr"], p["ws"]], axis=0)   # (2*C_in, H)
    bo = jnp.concatenate([p["br"], p["bs"]], axis=0)   # (2*C_in, 1)

    def full(shape):
        return pl.BlockSpec(shape, lambda b: (0,) * len(shape))

    smem = pl.BlockSpec(memory_space=pltpu.MemorySpace.SMEM)

    in_specs = [
        pl.BlockSpec((1, C_in, T), lambda b: (b, 0, 0)),   # x
        full((H, C_in)), full((H, 1)),                     # w1, b1
        full((H, 1)), full((H, 1)),                        # gn1 weight, bias
        full((H, kernel)), full((H, 1)),                   # depthwise w, b
        full((1, H)), full((1, H)),                        # gn2 weight, bias (row vecs)
        full((2 * C_in, H)), full((2 * C_in, 1)),          # fused out w, b
        smem, smem,                                        # PReLU scalars a1, a2
    ]
    out_specs = [pl.BlockSpec((1, C_in, T_out), lambda b: (b, 0, 0))] * 2
    out_shape = [jax.ShapeDtypeStruct((B, C_in, T_out), jnp.float32)] * 2

    # Rough per-step VMEM budget (f32): double-buffered input/outputs, padded
    # scratch slab, a few full (H,T)-sized live values, resident weights.
    est = 4 * (2 * C_in * T * 2
               + 2 * 2 * C_in * T_out * 2
               + H * (T + 2 * padding)
               + 4 * H * max(T, T_out)
               + 2 * (H * C_in + 2 * C_in * H + H * kernel + 8 * H + 4 * C_in))
    vmem_limit = int(min(max(2 * est, 32 << 20), 64 << 20))

    kern = functools.partial(depthconv1d_kernel, kernel=kernel, dilation=dilation,
                             padding=padding, eps=eps, c_in=C_in)
    return pl.pallas_call(
        kern,
        out_shape=out_shape,
        grid_spec=pltpu.PrefetchScalarGridSpec(
            num_scalar_prefetch=0, grid=(B,),
            in_specs=in_specs, out_specs=out_specs,
            scratch_shapes=[pltpu.VMEM((H, T + 2 * padding), jnp.float32)]),
        compiler_params=pltpu.CompilerParams(
            dimension_semantics=("parallel",),
            vmem_limit_bytes=vmem_limit),
    )(x, p["w1"], p["b1"], p["g1w"], p["g1b"],
      p["wd"], p["bd"], p["g2w"], p["g2b"],
      wo, bo, p["a1"], p["a2"])


def init_params(key, input_channel, hidden_channel, kernel):
    """Deterministic synthetic init mirroring the module's parameter shapes."""
    ks = jax.random.split(key, 8)
    u = lambda k, shape, bound: jax.random.uniform(
        k, shape, jnp.float32, minval=-bound, maxval=bound)
    b1x1 = 1.0 / jnp.sqrt(input_channel)
    bdep = 1.0 / jnp.sqrt(kernel)            # depthwise: fan_in = 1 * kernel
    bout = 1.0 / jnp.sqrt(hidden_channel)
    return {
        # conv1d: (H, Cin, 1) -> (H, Cin); bias (H,) -> (H,1)
        "w1": u(ks[0], (hidden_channel, input_channel), b1x1),
        "b1": u(ks[1], (hidden_channel, 1), b1x1),
        "a1": jnp.full((1,), 0.25, jnp.float32),          # PReLU (num_parameters=1)
        "g1w": jnp.ones((hidden_channel, 1), jnp.float32),
        "g1b": jnp.zeros((hidden_channel, 1), jnp.float32),
        # dconv1d: (H, 1, K) -> (H, K); bias (H,) -> (H,1)
        "wd": u(ks[2], (hidden_channel, kernel), bdep),
        "bd": u(ks[3], (hidden_channel, 1), bdep),
        "a2": jnp.full((1,), 0.25, jnp.float32),
        "g2w": jnp.ones((1, hidden_channel), jnp.float32),
        "g2b": jnp.zeros((1, hidden_channel), jnp.float32),
        # res_out / skip_out: (Cin, H, 1) -> (Cin, H); bias (Cin,) -> (Cin,1)
        "wr": u(ks[4], (input_channel, hidden_channel), bout),
        "br": u(ks[5], (input_channel, 1), bout),
        "ws": u(ks[6], (input_channel, hidden_channel), bout),
        "bs": u(ks[7], (input_channel, 1), bout),
    }


def reference(x, p, *, kernel, dilation, padding, eps=1e-8):
    """Pure-JAX reference matching the PyTorch forward (two-pass GN, unfused)."""
    def conv1x1(x, w, b):
        return jnp.einsum('oc,bct->bot', w, x) + b.reshape(1, -1, 1)

    def prelu(x, a):
        return jnp.where(x >= 0, x, a * x)

    def gn(x, w, b):
        mean = x.mean(axis=(1, 2), keepdims=True)
        var = ((x - mean) ** 2).mean(axis=(1, 2), keepdims=True)
        return (x - mean) / jnp.sqrt(var + eps) * w.reshape(1, -1, 1) + b.reshape(1, -1, 1)

    h = gn(prelu(conv1x1(x, p["w1"], p["b1"]), p["a1"][0]), p["g1w"], p["g1b"])
    B, H, T = h.shape
    T_out = T + 2 * padding - dilation * (kernel - 1)
    hp = jnp.pad(h, ((0, 0), (0, 0), (padding, padding)))
    acc = jnp.broadcast_to(p["bd"].reshape(1, -1, 1), (B, H, T_out)).astype(jnp.float32)
    for k in range(kernel):
        acc = acc + p["wd"][None, :, k:k + 1] * hp[:, :, k * dilation:k * dilation + T_out]
    h2 = gn(prelu(acc, p["a2"][0]), p["g2w"], p["g2b"])
    return conv1x1(h2, p["wr"], p["br"]), conv1x1(h2, p["ws"], p["bs"])


if __name__ == "__main__":
    # Small shapes consistent with GC_TCN's per-group DepthConv1d blocks.
    # T chosen as a multiple of 128 so output stores are lane-dense.
    B, C_in, H, T = 2, 8, 16, 128
    KERNEL, DILATION, PADDING = 3, 2, 2   # "same" length: T_out == T

    key = jax.random.PRNGKey(0)
    kx, kp = jax.random.split(key)
    x = jax.random.normal(kx, (B, C_in, T), dtype=jnp.float32)
    params = init_params(kp, C_in, H, KERNEL)

    res, skip = depth_conv1d(x, params, kernel=KERNEL, dilation=DILATION,
                             padding=PADDING)
    jax.block_until_ready(res)
    jax.block_until_ready(skip)

    res_ref, skip_ref = reference(x, params, kernel=KERNEL, dilation=DILATION,
                                  padding=PADDING)
    assert res.shape == res_ref.shape and skip.shape == skip_ref.shape
    assert jnp.allclose(res, res_ref, rtol=2e-4, atol=2e-4)
    assert jnp.allclose(skip, skip_ref, rtol=2e-4, atol=2e-4)

    print("KERNEL_OK")
</pallas_src>

<mosaic_0001>
module attributes {stable_mosaic.version = 11 : i64} {
  func.func @depthconv1d_kernel(%arg0: i32, %arg1: memref<1x8x128xf32, #tpu.memory_space<vmem>>, %arg2: memref<16x8xf32, #tpu.memory_space<vmem>>, %arg3: memref<16x1xf32, #tpu.memory_space<vmem>>, %arg4: memref<16x1xf32, #tpu.memory_space<vmem>>, %arg5: memref<16x1xf32, #tpu.memory_space<vmem>>, %arg6: memref<16x3xf32, #tpu.memory_space<vmem>>, %arg7: memref<16x1xf32, #tpu.memory_space<vmem>>, %arg8: memref<1x16xf32, #tpu.memory_space<vmem>>, %arg9: memref<1x16xf32, #tpu.memory_space<vmem>>, %arg10: memref<16x16xf32, #tpu.memory_space<vmem>>, %arg11: memref<16x1xf32, #tpu.memory_space<vmem>>, %arg12: memref<1xf32, #tpu.memory_space<smem>>, %arg13: memref<1xf32, #tpu.memory_space<smem>>, %arg14: memref<1x8x128xf32, #tpu.memory_space<vmem>>, %arg15: memref<1x8x128xf32, #tpu.memory_space<vmem>>, %arg16: memref<16x132xf32, #tpu.memory_space<vmem>>) attributes {dimension_semantics = [#tpu.dimension_semantics<parallel>], iteration_bounds = array<i64: 2>, scalar_prefetch = 0 : i64, scratch_operands = 1 : i64, tpu.core_type = #tpu.core_type<tc>, window_params = [{transform_indices = @transform_0, window_bounds = array<i64: 1, 8, 128>}, {pipeline_mode = #tpu.pipeline_mode<synchronous>, transform_indices = @transform_1, window_bounds = array<i64: 16, 8>}, {pipeline_mode = #tpu.pipeline_mode<synchronous>, transform_indices = @transform_2, window_bounds = array<i64: 16, 1>}, {pipeline_mode = #tpu.pipeline_mode<synchronous>, transform_indices = @transform_3, window_bounds = array<i64: 16, 1>}, {pipeline_mode = #tpu.pipeline_mode<synchronous>, transform_indices = @transform_4, window_bounds = array<i64: 16, 1>}, {pipeline_mode = #tpu.pipeline_mode<synchronous>, transform_indices = @transform_5, window_bounds = array<i64: 16, 3>}, {pipeline_mode = #tpu.pipeline_mode<synchronous>, transform_indices = @transform_6, window_bounds = array<i64: 16, 1>}, {pipeline_mode = #tpu.pipeline_mode<synchronous>, transform_indices = @transform_7, window_bounds = array<i64: 1, 16>}, {pipeline_mode = #tpu.pipeline_mode<synchronous>, transform_indices = @transform_8, window_bounds = array<i64: 1, 16>}, {pipeline_mode = #tpu.pipeline_mode<synchronous>, transform_indices = @transform_9, window_bounds = array<i64: 16, 16>}, {pipeline_mode = #tpu.pipeline_mode<synchronous>, transform_indices = @transform_10, window_bounds = array<i64: 16, 1>}, {transform_indices = @transform_11, window_bounds = array<i64: 1>}, {transform_indices = @transform_12, window_bounds = array<i64: 1>}, {transform_indices = @transform_13, window_bounds = array<i64: 1, 8, 128>}, {transform_indices = @transform_14, window_bounds = array<i64: 1, 8, 128>}]} {
    %c0 = arith.constant 0 : index
    %c0_0 = arith.constant 0 : index
    %c0_1 = arith.constant 0 : index
    %0 = vector.load %arg1[%c0, %c0_0, %c0_1] : memref<1x8x128xf32, #tpu.memory_space<vmem>>, vector<1x8x128xf32>
    %1 = vector.shape_cast %0 : vector<1x8x128xf32> to vector<8x128xf32>
    %c0_2 = arith.constant 0 : index
    %c0_3 = arith.constant 0 : index
    %2 = vector.load %arg2[%c0_2, %c0_3] : memref<16x8xf32, #tpu.memory_space<vmem>>, vector<16x8xf32>
    %cst = arith.constant dense<0.000000e+00> : vector<16x128xf32>
    %3 = tpu.matmul %2, %1, %cst {dimension_numbers = #tpu.dot_dimension_numbers<[1], [0], [0], [1], [0, 0, 1, 1], [], []>} : vector<16x8xf32>, vector<8x128xf32>, vector<16x128xf32> -> vector<16x128xf32>
    %c0_4 = arith.constant 0 : index
    %c0_5 = arith.constant 0 : index
    %4 = vector.load %arg3[%c0_4, %c0_5] : memref<16x1xf32, #tpu.memory_space<vmem>>, vector<16x1xf32>
    %5 = vector.broadcast %4 : vector<16x1xf32> to vector<16x128xf32>
    %6 = arith.addf %3, %5 : vector<16x128xf32>
    %c0_6 = arith.constant 0 : index
    %7 = memref.load %arg12[%c0_6] : memref<1xf32, #tpu.memory_space<smem>>
    %cst_7 = arith.constant 0.000000e+00 : f32
    %8 = vector.broadcast %cst_7 : f32 to vector<16x128xf32>
    %9 = arith.cmpf oge, %6, %8 : vector<16x128xf32>
    %10 = vector.broadcast %7 : f32 to vector<16x128xf32>
    %11 = arith.mulf %10, %6 : vector<16x128xf32>
    %12 = arith.select %9, %6, %11 : vector<16x128xi1>, vector<16x128xf32>
    %13 = vector.shape_cast %12 : vector<16x128xf32> to vector<1x16x128xf32>
    %cst_8 = arith.constant dense<0.000000e+00> : vector<1xf32>
    %14 = vector.multi_reduction <add>, %13, %cst_8 [1, 2] : vector<1x16x128xf32> to vector<1xf32>
    %15 = vector.shape_cast %14 : vector<1xf32> to vector<1x1x1xf32>
    %16 = vector.extract %15[0, 0, 0] : f32 from vector<1x1x1xf32>
    %17 = arith.mulf %12, %12 : vector<16x128xf32>
    %18 = vector.shape_cast %17 : vector<16x128xf32> to vector<1x16x128xf32>
    %cst_9 = arith.constant dense<0.000000e+00> : vector<1xf32>
    %19 = vector.multi_reduction <add>, %18, %cst_9 [1, 2] : vector<1x16x128xf32> to vector<1xf32>
    %20 = vector.shape_cast %19 : vector<1xf32> to vector<1x1x1xf32>
    %21 = vector.extract %20[0, 0, 0] : f32 from vector<1x1x1xf32>
    %cst_10 = arith.constant 4.8828125E-4 : f32
    %22 = arith.mulf %16, %cst_10 : f32
    %cst_11 = arith.constant 4.8828125E-4 : f32
    %23 = arith.mulf %21, %cst_11 : f32
    %24 = arith.mulf %22, %22 : f32
    %25 = arith.subf %23, %24 : f32
    %cst_12 = arith.constant 9.99999993E-9 : f32
    %26 = arith.addf %25, %cst_12 : f32
    %27 = math.rsqrt %26 : f32
    %c0_13 = arith.constant 0 : index
    %c0_14 = arith.constant 0 : index
    %28 = vector.load %arg4[%c0_13, %c0_14] : memref<16x1xf32, #tpu.memory_space<vmem>>, vector<16x1xf32>
    %29 = vector.broadcast %27 : f32 to vector<16x1xf32>
    %30 = arith.mulf %29, %28 : vector<16x1xf32>
    %c0_15 = arith.constant 0 : index
    %c0_16 = arith.constant 0 : index
    %31 = vector.load %arg5[%c0_15, %c0_16] : memref<16x1xf32, #tpu.memory_space<vmem>>, vector<16x1xf32>
    %32 = vector.broadcast %22 : f32 to vector<16x1xf32>
    %33 = arith.mulf %32, %30 : vector<16x1xf32>
    %34 = arith.subf %31, %33 : vector<16x1xf32>
    %35 = vector.broadcast %30 : vector<16x1xf32> to vector<16x128xf32>
    %36 = arith.mulf %12, %35 : vector<16x128xf32>
    %37 = vector.broadcast %34 : vector<16x1xf32> to vector<16x128xf32>
    %38 = arith.addf %36, %37 : vector<16x128xf32>
    %cst_17 = arith.constant 0.000000e+00 : f32
    %39 = vector.broadcast %cst_17 : f32 to vector<16x2xf32>
    %c0_18 = arith.constant 0 : index
    %c0_19 = arith.constant 0 : index
    %40 = vector.load %arg16[%c0_18, %c0_19] : memref<16x132xf32, #tpu.memory_space<vmem>>, vector<16x2xf32>
    tpu.vector_store %arg16[%c0_18, %c0_19], %39 {strides = array<i32>} : memref<16x132xf32, #tpu.memory_space<vmem>>, vector<16x2xf32>,
    %cst_20 = arith.constant 0.000000e+00 : f32
    %41 = vector.broadcast %cst_20 : f32 to vector<16x2xf32>
    %c0_21 = arith.constant 0 : index
    %c130 = arith.constant 130 : index
    %42 = vector.load %arg16[%c0_21, %c130] : memref<16x132xf32, #tpu.memory_space<vmem>>, vector<16x2xf32>
    tpu.vector_store %arg16[%c0_21, %c130], %41 {strides = array<i32>} : memref<16x132xf32, #tpu.memory_space<vmem>>, vector<16x2xf32>,
    %c0_22 = arith.constant 0 : index
    %c2 = arith.constant 2 : index
    %43 = vector.load %arg16[%c0_22, %c2] : memref<16x132xf32, #tpu.memory_space<vmem>>, vector<16x128xf32>
    tpu.vector_store %arg16[%c0_22, %c2], %38 {strides = array<i32>} : memref<16x132xf32, #tpu.memory_space<vmem>>, vector<16x128xf32>,
    %c0_23 = arith.constant 0 : index
    %c0_24 = arith.constant 0 : index
    %44 = vector.load %arg7[%c0_23, %c0_24] : memref<16x1xf32, #tpu.memory_space<vmem>>, vector<16x1xf32>
    %c0_25 = arith.constant 0 : index
    %c0_26 = arith.constant 0 : index
    %45 = vector.load %arg6[%c0_25, %c0_26] : memref<16x3xf32, #tpu.memory_space<vmem>>, vector<16x1xf32>
    %c0_27 = arith.constant 0 : index
    %c0_28 = arith.constant 0 : index
    %46 = vector.load %arg16[%c0_27, %c0_28] : memref<16x132xf32, #tpu.memory_space<vmem>>, vector<16x128xf32>
    %47 = vector.broadcast %45 : vector<16x1xf32> to vector<16x128xf32>
    %48 = arith.mulf %47, %46 : vector<16x128xf32>
    %49 = vector.broadcast %44 : vector<16x1xf32> to vector<16x128xf32>
    %50 = arith.addf %49, %48 : vector<16x128xf32>
    %c0_29 = arith.constant 0 : index
    %c1 = arith.constant 1 : index
    %51 = vector.load %arg6[%c0_29, %c1] : memref<16x3xf32, #tpu.memory_space<vmem>>, vector<16x1xf32>
    %c0_30 = arith.constant 0 : index
    %c2_31 = arith.constant 2 : index
    %52 = vector.load %arg16[%c0_30, %c2_31] : memref<16x132xf32, #tpu.memory_space<vmem>>, vector<16x128xf32>
    %53 = vector.broadcast %51 : vector<16x1xf32> to vector<16x128xf32>
    %54 = arith.mulf %53, %52 : vector<16x128xf32>
    %55 = arith.addf %50, %54 : vector<16x128xf32>
    %c0_32 = arith.constant 0 : index
    %c2_33 = arith.constant 2 : index
    %56 = vector.load %arg6[%c0_32, %c2_33] : memref<16x3xf32, #tpu.memory_space<vmem>>, vector<16x1xf32>
    %c0_34 = arith.constant 0 : index
    %c4 = arith.constant 4 : index
    %57 = vector.load %arg16[%c0_34, %c4] : memref<16x132xf32, #tpu.memory_space<vmem>>, vector<16x128xf32>
    %58 = vector.broadcast %56 : vector<16x1xf32> to vector<16x128xf32>
    %59 = arith.mulf %58, %57 : vector<16x128xf32>
    %60 = arith.addf %55, %59 : vector<16x128xf32>
    %c0_35 = arith.constant 0 : index
    %61 = memref.load %arg13[%c0_35] : memref<1xf32, #tpu.memory_space<smem>>
    %cst_36 = arith.constant 0.000000e+00 : f32
    %62 = vector.broadcast %cst_36 : f32 to vector<16x128xf32>
    %63 = arith.cmpf oge, %60, %62 : vector<16x128xf32>
    %64 = vector.broadcast %61 : f32 to vector<16x128xf32>
    %65 = arith.mulf %64, %60 : vector<16x128xf32>
    %66 = arith.select %63, %60, %65 : vector<16x128xi1>, vector<16x128xf32>
    %67 = vector.shape_cast %66 : vector<16x128xf32> to vector<1x16x128xf32>
    %cst_37 = arith.constant dense<0.000000e+00> : vector<1xf32>
    %68 = vector.multi_reduction <add>, %67, %cst_37 [1, 2] : vector<1x16x128xf32> to vector<1xf32>
    %69 = vector.shape_cast %68 : vector<1xf32> to vector<1x1x1xf32>
    %70 = vector.extract %69[0, 0, 0] : f32 from vector<1x1x1xf32>
    %71 = arith.mulf %66, %66 : vector<16x128xf32>
    %72 = vector.shape_cast %71 : vector<16x128xf32> to vector<1x16x128xf32>
    %cst_38 = arith.constant dense<0.000000e+00> : vector<1xf32>
    %73 = vector.multi_reduction <add>, %72, %cst_38 [1, 2] : vector<1x16x128xf32> to vector<1xf32>
    %74 = vector.shape_cast %73 : vector<1xf32> to vector<1x1x1xf32>
    %75 = vector.extract %74[0, 0, 0] : f32 from vector<1x1x1xf32>
    %cst_39 = arith.constant 4.8828125E-4 : f32
    %76 = arith.mulf %70, %cst_39 : f32
    %cst_40 = arith.constant 4.8828125E-4 : f32
    %77 = arith.mulf %75, %cst_40 : f32
    %78 = arith.mulf %76, %76 : f32
    %79 = arith.subf %77, %78 : f32
    %cst_41 = arith.constant 9.99999993E-9 : f32
    %80 = arith.addf %79, %cst_41 : f32
    %81 = math.rsqrt %80 : f32
    %c0_42 = arith.constant 0 : index
    %c0_43 = arith.constant 0 : index
    %82 = vector.load %arg8[%c0_42, %c0_43] : memref<1x16xf32, #tpu.memory_space<vmem>>, vector<1x16xf32>
    %83 = vector.broadcast %81 : f32 to vector<1x16xf32>
    %84 = arith.mulf %83, %82 : vector<1x16xf32>
    %c0_44 = arith.constant 0 : index
    %c0_45 = arith.constant 0 : index
    %85 = vector.load %arg9[%c0_44, %c0_45] : memref<1x16xf32, #tpu.memory_space<vmem>>, vector<1x16xf32>
    %86 = vector.broadcast %76 : f32 to vector<1x16xf32>
    %87 = arith.mulf %86, %84 : vector<1x16xf32>
    %88 = arith.subf %85, %87 : vector<1x16xf32>
    %c0_46 = arith.constant 0 : index
    %c0_47 = arith.constant 0 : index
    %89 = vector.load %arg10[%c0_46, %c0_47] : memref<16x16xf32, #tpu.memory_space<vmem>>, vector<16x16xf32>
    %90 = vector.broadcast %84 : vector<1x16xf32> to vector<16x16xf32>
    %91 = arith.mulf %89, %90 : vector<16x16xf32>
    %c0_48 = arith.constant 0 : index
    %c0_49 = arith.constant 0 : index
    %92 = vector.load %arg11[%c0_48, %c0_49] : memref<16x1xf32, #tpu.memory_space<vmem>>, vector<16x1xf32>
    %93 = vector.broadcast %88 : vector<1x16xf32> to vector<16x16xf32>
    %94 = arith.mulf %89, %93 : vector<16x16xf32>
    %cst_50 = arith.constant dense<0.000000e+00> : vector<16xf32>
    %95 = vector.multi_reduction <add>, %94, %cst_50 [1] : vector<16x16xf32> to vector<16xf32>
    %96 = vector.shape_cast %95 : vector<16xf32> to vector<16x1xf32>
    %97 = arith.addf %92, %96 : vector<16x1xf32>
    %cst_51 = arith.constant dense<0.000000e+00> : vector<16x128xf32>
    %98 = tpu.matmul %91, %66, %cst_51 {dimension_numbers = #tpu.dot_dimension_numbers<[1], [0], [0], [1], [0, 0, 1, 1], [], []>} : vector<16x16xf32>, vector<16x128xf32>, vector<16x128xf32> -> vector<16x128xf32>
    %99 = vector.broadcast %97 : vector<16x1xf32> to vector<16x128xf32>
    %100 = arith.addf %98, %99 : vector<16x128xf32>
    %101 = vector.extract_strided_slice %100 {offsets = [0, 0], sizes = [8, 128], strides = [1, 1]} : vector<16x128xf32> to vector<8x128xf32>
    %c0_52 = arith.constant 0 : index
    %c0_53 = arith.constant 0 : index
    %c0_54 = arith.constant 0 : index
    %102 = vector.load %arg14[%c0_52, %c0_53, %c0_54] : memref<1x8x128xf32, #tpu.memory_space<vmem>>, vector<1x8x128xf32>
    %103 = vector.shape_cast %102 : vector<1x8x128xf32> to vector<8x128xf32>
    %104 = vector.shape_cast %101 : vector<8x128xf32> to vector<1x8x128xf32>
    tpu.vector_store %arg14[%c0_52, %c0_53, %c0_54], %104 {strides = array<i32>} : memref<1x8x128xf32, #tpu.memory_space<vmem>>, vector<1x8x128xf32>,
    %105 = vector.extract_strided_slice %100 {offsets = [8, 0], sizes = [8, 128], strides = [1, 1]} : vector<16x128xf32> to vector<8x128xf32>
    %c0_55 = arith.constant 0 : index
    %c0_56 = arith.constant 0 : index
    %c0_57 = arith.constant 0 : index
    %106 = vector.load %arg15[%c0_55, %c0_56, %c0_57] : memref<1x8x128xf32, #tpu.memory_space<vmem>>, vector<1x8x128xf32>
    %107 = vector.shape_cast %106 : vector<1x8x128xf32> to vector<8x128xf32>
    %108 = vector.shape_cast %105 : vector<8x128xf32> to vector<1x8x128xf32>
    tpu.vector_store %arg15[%c0_55, %c0_56, %c0_57], %108 {strides = array<i32>} : memref<1x8x128xf32, #tpu.memory_space<vmem>>, vector<1x8x128xf32>,
    return
  }
  func.func @transform_0(%arg0: i32) -> (i32, i32, i32) {
    %c0_i32 = arith.constant 0 : i32
    %c0_i32_0 = arith.constant 0 : i32
    %c0_i32_1 = arith.constant 0 : i32
    return %arg0, %c0_i32, %c0_i32_0 : i32, i32, i32
  }
  func.func @transform_1(%arg0: i32) -> (i32, i32) {
    %c0_i32 = arith.constant 0 : i32
    %c0_i32_0 = arith.constant 0 : i32
    %c0_i32_1 = arith.constant 0 : i32
    return %c0_i32, %c0_i32_0 : i32, i32
  }
  func.func @transform_2(%arg0: i32) -> (i32, i32) {
    %c0_i32 = arith.constant 0 : i32
    %c0_i32_0 = arith.constant 0 : i32
    %c0_i32_1 = arith.constant 0 : i32
    return %c0_i32, %c0_i32_0 : i32, i32
  }
  func.func @transform_3(%arg0: i32) -> (i32, i32) {
    %c0_i32 = arith.constant 0 : i32
    %c0_i32_0 = arith.constant 0 : i32
    %c0_i32_1 = arith.constant 0 : i32
    return %c0_i32, %c0_i32_0 : i32, i32
  }
  func.func @transform_4(%arg0: i32) -> (i32, i32) {
    %c0_i32 = arith.constant 0 : i32
    %c0_i32_0 = arith.constant 0 : i32
    %c0_i32_1 = arith.constant 0 : i32
    return %c0_i32, %c0_i32_0 : i32, i32
  }
  func.func @transform_5(%arg0: i32) -> (i32, i32) {
    %c0_i32 = arith.constant 0 : i32
    %c0_i32_0 = arith.constant 0 : i32
    %c0_i32_1 = arith.constant 0 : i32
    return %c0_i32, %c0_i32_0 : i32, i32
  }
  func.func @transform_6(%arg0: i32) -> (i32, i32) {
    %c0_i32 = arith.constant 0 : i32
    %c0_i32_0 = arith.constant 0 : i32
    %c0_i32_1 = arith.constant 0 : i32
    return %c0_i32, %c0_i32_0 : i32, i32
  }
  func.func @transform_7(%arg0: i32) -> (i32, i32) {
    %c0_i32 = arith.constant 0 : i32
    %c0_i32_0 = arith.constant 0 : i32
    %c0_i32_1 = arith.constant 0 : i32
    return %c0_i32, %c0_i32_0 : i32, i32
  }
  func.func @transform_8(%arg0: i32) -> (i32, i32) {
    %c0_i32 = arith.constant 0 : i32
    %c0_i32_0 = arith.constant 0 : i32
    %c0_i32_1 = arith.constant 0 : i32
    return %c0_i32, %c0_i32_0 : i32, i32
  }
  func.func @transform_9(%arg0: i32) -> (i32, i32) {
    %c0_i32 = arith.constant 0 : i32
    %c0_i32_0 = arith.constant 0 : i32
    %c0_i32_1 = arith.constant 0 : i32
    return %c0_i32, %c0_i32_0 : i32, i32
  }
  func.func @transform_10(%arg0: i32) -> (i32, i32) {
    %c0_i32 = arith.constant 0 : i32
    %c0_i32_0 = arith.constant 0 : i32
    %c0_i32_1 = arith.constant 0 : i32
    return %c0_i32, %c0_i32_0 : i32, i32
  }
  func.func @transform_11(%arg0: i32) -> i32 {
    %c0_i32 = arith.constant 0 : i32
    %c0_i32_0 = arith.constant 0 : i32
    return %c0_i32 : i32
  }
  func.func @transform_12(%arg0: i32) -> i32 {
    %c0_i32 = arith.constant 0 : i32
    %c0_i32_0 = arith.constant 0 : i32
    return %c0_i32 : i32
  }
  func.func @transform_13(%arg0: i32) -> (i32, i32, i32) {
    %c0_i32 = arith.constant 0 : i32
    %c0_i32_0 = arith.constant 0 : i32
    %c0_i32_1 = arith.constant 0 : i32
    return %arg0, %c0_i32, %c0_i32_0 : i32, i32, i32
  }
  func.func @transform_14(%arg0: i32) -> (i32, i32, i32) {
    %c0_i32 = arith.constant 0 : i32
    %c0_i32_0 = arith.constant 0 : i32
    %c0_i32_1 = arith.constant 0 : i32
    return %arg0, %c0_i32, %c0_i32_0 : i32, i32, i32
  }
}

</mosaic_0001>

<llo_original>
// kernel: tpu_custom_call.1
$region0: #{tpu_custom_call.1}
  #allocation0 [shape = 'u32[]', space=smem, size = 0x4, offset = 0x4, fixed_abs, tag = 'smem constant byte address 0x4 - core index']
  #allocation1 [shape = 'u32[144,128]{1,0:T(1,128)}', space=vmem, size = 0x12000, scoped, tag = 'internal scratch']
  #allocation2 [shape = 'f32[16,132]{1,0:T(8,128)}', space=vmem, size = 0x4000, scoped, tag = 'scratch operand']
  #allocation3 [shape = 'f32[1]{0:T(128)S(6)}', space=smem, size = 0x200, scoped, tag = 'scoped memory for tpu_custom_call.1']
  #allocation4 [shape = 'f32[1]{0:T(128)S(6)}', space=smem, size = 0x200, scoped, tag = 'scoped memory for tpu_custom_call.1']
  %s0 = inlined_call_operand.vmem [shape: f32[2,8,128], index: 0, kind: input, shape index: {}]
  %s1 = inlined_call_operand.vmem [shape: f32[16,8], index: 1, kind: input, shape index: {}]
  %s2 = inlined_call_operand.vmem [shape: f32[16,1], index: 2, kind: input, shape index: {}]
  %s3 = inlined_call_operand.vmem [shape: f32[16,1], index: 3, kind: input, shape index: {}]
  %s4 = inlined_call_operand.vmem [shape: f32[16,1], index: 4, kind: input, shape index: {}]
  %s5 = inlined_call_operand.vmem [shape: f32[16,3], index: 5, kind: input, shape index: {}]
  %s6 = inlined_call_operand.vmem [shape: f32[16,1], index: 6, kind: input, shape index: {}]
  %s7 = inlined_call_operand.vmem [shape: f32[1,16], index: 7, kind: input, shape index: {}]
  %s8 = inlined_call_operand.vmem [shape: f32[1,16], index: 8, kind: input, shape index: {}]
  %s9 = inlined_call_operand.vmem [shape: f32[16,16], index: 9, kind: input, shape index: {}]
  %s10 = inlined_call_operand.vmem [shape: f32[16,1], index: 10, kind: input, shape index: {}]
  %s11 = inlined_call_operand.<no memory space> [shape: f32[1], index: 11, kind: input, shape index: {}]
  %s12 = inlined_call_operand.<no memory space> [shape: f32[1], index: 12, kind: input, shape index: {}]
  %s13 = inlined_call_operand.hbm [shape: f32[2,8,128], index: 13, kind: output, shape index: {0}]
  %s14 = inlined_call_operand.hbm [shape: f32[2,8,128], index: 14, kind: output, shape index: {1}]
  %15 = xla_tuple %s13, %s14
  %s16 = sld [smem:[#allocation0]]
  $region93: #{tpu_custom_call.1} parent=0
    _
  %s18 = ssub.s32 1, %s16
  %s19 = scalar_select 0, %s18, %s16
  %20 = sst [smem:[#allocation3]] %s11
  %21 = sst [smem:[#allocation4]] %s12
  $region1: #{tpu_custom_call.1} parent=0
    #allocation5 [shape = 'u8[8192]{0}', space=vmem, size = 0x2000, scoped, tag = 'output window, operand 0']
    #allocation6 [shape = 's32[2]{0}', space=sflag, size = 0x8, scoped, tag = 'scoped memory for tpu_custom_call.1']
    #allocation7 [shape = 'u8[8192]{0}', space=vmem, size = 0x2000, scoped, tag = 'output window, operand 1']
    #allocation8 [shape = 's32[2]{0}', space=sflag, size = 0x8, scoped, tag = 'scoped memory for tpu_custom_call.1']
    %22 = vsyncpa [#allocation6], 0
    %s23 = scalar_lea.sflag [#allocation6], 1
    %24 = vsyncpa %s23, 0
    %25 = vsyncpa [#allocation8], 0
    %s26 = scalar_lea.sflag [#allocation8], 1
    %27 = vsyncpa %s26, 0
    loop: start=0, step=1, limit=4
    $region2: #{tpu_custom_call.1} parent=1 // loop_pre_header
      _
    $region3: #{tpu_custom_call.1} parent=1 // loop_header
      %s29 = sphi 0, %s33
      %p30 = scmp.ge.s32.totalorder %s29, 4
      %s39 = sphi 0, %s41
      %s42 = sphi 0, %s39
      %s43 = sphi 0, %s42
      %s59 = sphi 0, %s43
      %s63 = sphi 0, %s63
      %s65 = sphi 0, %s63
      %s66 = sphi 0, %s65
      %s80 = sphi 0, %s66
      %s84 = sphi 0, %s84
      %s86 = sphi 0, %s84
      %s87 = sphi 0, %s86
      %s101 = sphi 0, %s87
      %s105 = sphi 0, %s105
      %s107 = sphi 0, %s105
      %s108 = sphi 0, %s107
      %s122 = sphi 0, %s108
      %s126 = sphi 0, %s126
      %s128 = sphi 0, %s126
      %s129 = sphi 0, %s128
      %s143 = sphi 0, %s129
      %s147 = sphi 0, %s147
      %s149 = sphi 0, %s147
      %s150 = sphi 0, %s149
      %s164 = sphi 0, %s150
      %s168 = sphi 0, %s168
      %s170 = sphi 0, %s168
      %s171 = sphi 0, %s170
      %s185 = sphi 0, %s171
      %s189 = sphi 0, %s189
      %s191 = sphi 0, %s189
      %s192 = sphi 0, %s191
      %s206 = sphi 0, %s192
      %s210 = sphi 0, %s210
      %s212 = sphi 0, %s210
      %s213 = sphi 0, %s212
      %s227 = sphi 0, %s213
      %s231 = sphi 0, %s231
      %s233 = sphi 0, %s231
      %s234 = sphi 0, %s233
      %s248 = sphi 0, %s234
      %s252 = sphi 0, %s252
      %s254 = sphi 0, %s252
      %s255 = sphi 0, %s254
      %s269 = sphi 0, %s255
      %s273 = sphi 0, %s273
      %s275 = sphi 0, %s273
      %s276 = sphi 0, %s275
      %s290 = sphi 0, %s276
      %s294 = sphi 0, %s294
      %s296 = sphi 0, %s294
      %s297 = sphi 0, %s296
      %s311 = sphi 0, %s297
      %s317 = sphi 0, %s319
      %s320 = sphi 0, %s317
      %s321 = sphi 0, %s320
      %s337 = sphi 0, %s321
      %s343 = sphi 0, %s345
      %s346 = sphi 0, %s343
      %s347 = sphi 0, %s346
      %s363 = sphi 0, %s347
    $region4: #{tpu_custom_call.1} parent=1 // loop_header_branch
      %32 = sbr.rel (%p30) target = $region8
    $region5: #{tpu_custom_call.1} parent=1 // loop_body
      %s34 = ssub.s32 %s29, 1
      %s35 = ssub.s32 %s29, 2
      %s36 = sadd.s32 %s29, 1
      %s37 = ssub.s32 %s29, %s36
      %p38 = scmp.eq.s32.totalorder %s37, 0
      %s40 = sadd.s32 %s39, 1
      %s41 = scalar_select %p38, %s39, %s40
      %p44 = pneg %p38
      %p45 = scmp.eq.s32.totalorder %s29, 1
      %p46 = por %p44, %p45
      %p47 = scmp.ne.s32.totalorder %s39, %s42
      %p48 = scmp.eq.s32.totalorder %s29, 0
      %p49 = por %p47, %p48
      %p50 = scmp.ne.s32.totalorder %s39, %s42
      %p51 = scmp.eq.s32.totalorder %s34, 1
      %p52 = por %p50, %p51
      %p53 = scmp.ne.s32.totalorder %s42, %s43
      %p54 = scmp.eq.s32.totalorder %s34, 0
      %p55 = por %p53, %p54
      %p56 = scmp.ne.s32.totalorder %s42, %s43
      %p57 = scmp.eq.s32.totalorder %s35, 1
      %p58 = por %p56, %p57
      %p60 = scmp.ne.s32.totalorder %s43, %s59
      %p61 = scmp.eq.s32.totalorder %s35, 0
      %p62 = por %p60, %p61
      %s64 = sadd.s32 %s63, 1
      %p67 = scmp.eq.s32.totalorder %s29, 1
      %p68 = scmp.ne.s32.totalorder %s63, %s65
      %p69 = scmp.eq.s32.totalorder %s29, 0
      %p70 = por %p68, %p69
      %p71 = scmp.ne.s32.totalorder %s63, %s65
      %p72 = scmp.eq.s32.totalorder %s34, 1
      %p73 = por %p71, %p72
      %p74 = scmp.ne.s32.totalorder %s65, %s66
      %p75 = scmp.eq.s32.totalorder %s34, 0
      %p76 = por %p74, %p75
      %p77 = scmp.ne.s32.totalorder %s65, %s66
      %p78 = scmp.eq.s32.totalorder %s35, 1
      %p79 = por %p77, %p78
      %p81 = scmp.ne.s32.totalorder %s66, %s80
      %p82 = scmp.eq.s32.totalorder %s35, 0
      %p83 = por %p81, %p82
      %s85 = sadd.s32 %s84, 1
      %p88 = scmp.eq.s32.totalorder %s29, 1
      %p89 = scmp.ne.s32.totalorder %s84, %s86
      %p90 = scmp.eq.s32.totalorder %s29, 0
      %p91 = por %p89, %p90
      %p92 = scmp.ne.s32.totalorder %s84, %s86
      %p93 = scmp.eq.s32.totalorder %s34, 1
      %p94 = por %p92, %p93
      %p95 = scmp.ne.s32.totalorder %s86, %s87
      %p96 = scmp.eq.s32.totalorder %s34, 0
      %p97 = por %p95, %p96
      %p98 = scmp.ne.s32.totalorder %s86, %s87
      %p99 = scmp.eq.s32.totalorder %s35, 1
      %p100 = por %p98, %p99
      %p102 = scmp.ne.s32.totalorder %s87, %s101
      %p103 = scmp.eq.s32.totalorder %s35, 0
      %p104 = por %p102, %p103
      %s106 = sadd.s32 %s105, 1
      %p109 = scmp.eq.s32.totalorder %s29, 1
      %p110 = scmp.ne.s32.totalorder %s105, %s107
      %p111 = scmp.eq.s32.totalorder %s29, 0
      %p112 = por %p110, %p111
      %p113 = scmp.ne.s32.totalorder %s105, %s107
      %p114 = scmp.eq.s32.totalorder %s34, 1
      %p115 = por %p113, %p114
      %p116 = scmp.ne.s32.totalorder %s107, %s108
      %p117 = scmp.eq.s32.totalorder %s34, 0
      %p118 = por %p116, %p117
      %p119 = scmp.ne.s32.totalorder %s107, %s108
      %p120 = scmp.eq.s32.totalorder %s35, 1
      %p121 = por %p119, %p120
      %p123 = scmp.ne.s32.totalorder %s108, %s122
      %p124 = scmp.eq.s32.totalorder %s35, 0
      %p125 = por %p123, %p124
      %s127 = sadd.s32 %s126, 1
      %p130 = scmp.eq.s32.totalorder %s29, 1
      %p131 = scmp.ne.s32.totalorder %s126, %s128
      %p132 = scmp.eq.s32.totalorder %s29, 0
      %p133 = por %p131, %p132
      %p134 = scmp.ne.s32.totalorder %s126, %s128
      %p135 = scmp.eq.s32.totalorder %s34, 1
      %p136 = por %p134, %p135
      %p137 = scmp.ne.s32.totalorder %s128, %s129
      %p138 = scmp.eq.s32.totalorder %s34, 0
      %p139 = por %p137, %p138
      %p140 = scmp.ne.s32.totalorder %s128, %s129
      %p141 = scmp.eq.s32.totalorder %s35, 1
      %p142 = por %p140, %p141
      %p144 = scmp.ne.s32.totalorder %s129, %s143
      %p145 = scmp.eq.s32.totalorder %s35, 0
      %p146 = por %p144, %p145
      %s148 = sadd.s32 %s147, 1
      %p151 = scmp.eq.s32.totalorder %s29, 1
      %p152 = scmp.ne.s32.totalorder %s147, %s149
      %p153 = scmp.eq.s32.totalorder %s29, 0
      %p154 = por %p152, %p153
      %p155 = scmp.ne.s32.totalorder %s147, %s149
      %p156 = scmp.eq.s32.totalorder %s34, 1
      %p157 = por %p155, %p156
      %p158 = scmp.ne.s32.totalorder %s149, %s150
      %p159 = scmp.eq.s32.totalorder %s34, 0
      %p160 = por %p158, %p159
      %p161 = scmp.ne.s32.totalorder %s149, %s150
      %p162 = scmp.eq.s32.totalorder %s35, 1
      %p163 = por %p161, %p162
      %p165 = scmp.ne.s32.totalorder %s150, %s164
      %p166 = scmp.eq.s32.totalorder %s35, 0
      %p167 = por %p165, %p166
      %s169 = sadd.s32 %s168, 1
      %p172 = scmp.eq.s32.totalorder %s29, 1
      %p173 = scmp.ne.s32.totalorder %s168, %s170
      %p174 = scmp.eq.s32.totalorder %s29, 0
      %p175 = por %p173, %p174
      %p176 = scmp.ne.s32.totalorder %s168, %s170
      %p177 = scmp.eq.s32.totalorder %s34, 1
      %p178 = por %p176, %p177
      %p179 = scmp.ne.s32.totalorder %s170, %s171
      %p180 = scmp.eq.s32.totalorder %s34, 0
      %p181 = por %p179, %p180
      %p182 = scmp.ne.s32.totalorder %s170, %s171
      %p183 = scmp.eq.s32.totalorder %s35, 1
      %p184 = por %p182, %p183
      %p186 = scmp.ne.s32.totalorder %s171, %s185
      %p187 = scmp.eq.s32.totalorder %s35, 0
      %p188 = por %p186, %p187
      %s190 = sadd.s32 %s189, 1
      %p193 = scmp.eq.s32.totalorder %s29, 1
      %p194 = scmp.ne.s32.totalorder %s189, %s191
      %p195 = scmp.eq.s32.totalorder %s29, 0
      %p196 = por %p194, %p195
      %p197 = scmp.ne.s32.totalorder %s189, %s191
      %p198 = scmp.eq.s32.totalorder %s34, 1
      %p199 = por %p197, %p198
      %p200 = scmp.ne.s32.totalorder %s191, %s192
      %p201 = scmp.eq.s32.totalorder %s34, 0
      %p202 = por %p200, %p201
      %p203 = scmp.ne.s32.totalorder %s191, %s192
      %p204 = scmp.eq.s32.totalorder %s35, 1
      %p205 = por %p203, %p204
      %p207 = scmp.ne.s32.totalorder %s192, %s206
      %p208 = scmp.eq.s32.totalorder %s35, 0
      %p209 = por %p207, %p208
      %s211 = sadd.s32 %s210, 1
      %p214 = scmp.eq.s32.totalorder %s29, 1
      %p215 = scmp.ne.s32.totalorder %s210, %s212
      %p216 = scmp.eq.s32.totalorder %s29, 0
      %p217 = por %p215, %p216
      %p218 = scmp.ne.s32.totalorder %s210, %s212
      %p219 = scmp.eq.s32.totalorder %s34, 1
      %p220 = por %p218, %p219
      %p221 = scmp.ne.s32.totalorder %s212, %s213
      %p222 = scmp.eq.s32.totalorder %s34, 0
      %p223 = por %p221, %p222
      %p224 = scmp.ne.s32.totalorder %s212, %s213
      %p225 = scmp.eq.s32.totalorder %s35, 1
      %p226 = por %p224, %p225
      %p228 = scmp.ne.s32.totalorder %s213, %s227
      %p229 = scmp.eq.s32.totalorder %s35, 0
      %p230 = por %p228, %p229
      %s232 = sadd.s32 %s231, 1
      %p235 = scmp.eq.s32.totalorder %s29, 1
      %p236 = scmp.ne.s32.totalorder %s231, %s233
      %p237 = scmp.eq.s32.totalorder %s29, 0
      %p238 = por %p236, %p237
      %p239 = scmp.ne.s32.totalorder %s231, %s233
      %p240 = scmp.eq.s32.totalorder %s34, 1
      %p241 = por %p239, %p240
      %p242 = scmp.ne.s32.totalorder %s233, %s234
      %p243 = scmp.eq.s32.totalorder %s34, 0
      %p244 = por %p242, %p243
      %p245 = scmp.ne.s32.totalorder %s233, %s234
      %p246 = scmp.eq.s32.totalorder %s35, 1
      %p247 = por %p245, %p246
      %p249 = scmp.ne.s32.totalorder %s234, %s248
      %p250 = scmp.eq.s32.totalorder %s35, 0
      %p251 = por %p249, %p250
      %s253 = sadd.s32 %s252, 1
      %p256 = scmp.eq.s32.totalorder %s29, 1
      %p257 = scmp.ne.s32.totalorder %s252, %s254
      %p258 = scmp.eq.s32.totalorder %s29, 0
      %p259 = por %p257, %p258
      %p260 = scmp.ne.s32.totalorder %s252, %s254
      %p261 = scmp.eq.s32.totalorder %s34, 1
      %p262 = por %p260, %p261
      %p263 = scmp.ne.s32.totalorder %s254, %s255
      %p264 = scmp.eq.s32.totalorder %s34, 0
      %p265 = por %p263, %p264
      %p266 = scmp.ne.s32.totalorder %s254, %s255
      %p267 = scmp.eq.s32.totalorder %s35, 1
      %p268 = por %p266, %p267
      %p270 = scmp.ne.s32.totalorder %s255, %s269
      %p271 = scmp.eq.s32.totalorder %s35, 0
      %p272 = por %p270, %p271
      %s274 = sadd.s32 %s273, 1
      %p277 = scmp.eq.s32.totalorder %s29, 1
      %p278 = scmp.ne.s32.totalorder %s273, %s275
      %p279 = scmp.eq.s32.totalorder %s29, 0
      %p280 = por %p278, %p279
      %p281 = scmp.ne.s32.totalorder %s273, %s275
      %p282 = scmp.eq.s32.totalorder %s34, 1
      %p283 = por %p281, %p282
      %p284 = scmp.ne.s32.totalorder %s275, %s276
      %p285 = scmp.eq.s32.totalorder %s34, 0
      %p286 = por %p284, %p285
      %p287 = scmp.ne.s32.totalorder %s275, %s276
      %p288 = scmp.eq.s32.totalorder %s35, 1
      %p289 = por %p287, %p288
      %p291 = scmp.ne.s32.totalorder %s276, %s290
      %p292 = scmp.eq.s32.totalorder %s35, 0
      %p293 = por %p291, %p292
      %s295 = sadd.s32 %s294, 1
      %p298 = scmp.eq.s32.totalorder %s29, 1
      %p299 = scmp.ne.s32.totalorder %s294, %s296
      %p300 = scmp.eq.s32.totalorder %s29, 0
      %p301 = por %p299, %p300
      %p302 = scmp.ne.s32.totalorder %s294, %s296
      %p303 = scmp.eq.s32.totalorder %s34, 1
      %p304 = por %p302, %p303
      %p305 = scmp.ne.s32.totalorder %s296, %s297
      %p306 = scmp.eq.s32.totalorder %s34, 0
      %p307 = por %p305, %p306
      %p308 = scmp.ne.s32.totalorder %s296, %s297
      %p309 = scmp.eq.s32.totalorder %s35, 1
      %p310 = por %p308, %p309
      %p312 = scmp.ne.s32.totalorder %s297, %s311
      %p313 = scmp.eq.s32.totalorder %s35, 0
      %p314 = por %p312, %p313
      %s315 = ssub.s32 %s29, %s36
      %p316 = scmp.eq.s32.totalorder %s315, 0
      %s318 = sadd.s32 %s317, 1
      %s319 = scalar_select %p316, %s317, %s318
      %p322 = pneg %p316
      %p323 = scmp.eq.s32.totalorder %s29, 1
      %p324 = por %p322, %p323
      %p325 = scmp.ne.s32.totalorder %s317, %s320
      %p326 = scmp.eq.s32.totalorder %s29, 0
      %p327 = por %p325, %p326
      %p328 = scmp.ne.s32.totalorder %s317, %s320
      %p329 = scmp.eq.s32.totalorder %s34, 1
      %p330 = por %p328, %p329
      %p331 = scmp.ne.s32.totalorder %s320, %s321
      %p332 = scmp.eq.s32.totalorder %s34, 0
      %p333 = por %p331, %p332
      %p334 = scmp.ne.s32.totalorder %s320, %s321
      %p335 = scmp.eq.s32.totalorder %s35, 1
      %p336 = por %p334, %p335
      %p338 = scmp.ne.s32.totalorder %s321, %s337
      %p339 = scmp.eq.s32.totalorder %s35, 0
      %p340 = por %p338, %p339
      %s341 = ssub.s32 %s29, %s36
      %p342 = scmp.eq.s32.totalorder %s341, 0
      %s344 = sadd.s32 %s343, 1
      %s345 = scalar_select %p342, %s343, %s344
      %p348 = pneg %p342
      %p349 = scmp.eq.s32.totalorder %s29, 1
      %p350 = por %p348, %p349
      %p351 = scmp.ne.s32.totalorder %s343, %s346
      %p352 = scmp.eq.s32.totalorder %s29, 0
      %p353 = por %p351, %p352
      %p354 = scmp.ne.s32.totalorder %s343, %s346
      %p355 = scmp.eq.s32.totalorder %s34, 1
      %p356 = por %p354, %p355
      %p357 = scmp.ne.s32.totalorder %s346, %s347
      %p358 = scmp.eq.s32.totalorder %s34, 0
      %p359 = por %p357, %p358
      %p360 = scmp.ne.s32.totalorder %s346, %s347
      %p361 = scmp.eq.s32.totalorder %s35, 1
      %p362 = por %p360, %p361
      %p364 = scmp.ne.s32.totalorder %s347, %s363
      %p365 = scmp.eq.s32.totalorder %s35, 0
      %p366 = por %p364, %p365
      %p367 = scmp.le.s32.totalorder 1, %s29
      %p368 = scmp.lt.s32.totalorder %s29, 3
      %p369 = pnand %p367, %p368
      %p370 = pneg %p369
      // Predicated region
      $region9: #{tpu_custom_call.1} parent=5 // pred_check
        _
      $region10: #{tpu_custom_call.1} parent=5 // pred_check_branch
        %372 = sbr.rel (%p369) target = $region12
      $region11: #{tpu_custom_call.1} parent=5 // pred_region
        %s373 = ssub.s32 %s29, 1
        // Predicated region
        $region13: #{tpu_custom_call.1} parent=11 // pred_check
          %p374 = pneg %p76
        $region14: #{tpu_custom_call.1} parent=11 // pred_check_branch
          %376 = sbr.rel (%p374) target = $region16
        $region15: #{tpu_custom_call.1} parent=11 // pred_region
          _
        $region16: #{tpu_custom_call.1} parent=11 // pred_fallthru
          _
        // Predicated region
        $region17: #{tpu_custom_call.1} parent=11 // pred_check
          %p377 = pneg %p97
        $region18: #{tpu_custom_call.1} parent=11 // pred_check_branch
          %379 = sbr.rel (%p377) target = $region20
        $region19: #{tpu_custom_call.1} parent=11 // pred_region
          _
        $region20: #{tpu_custom_call.1} parent=11 // pred_fallthru
          _
        // Predicated region
        $region21: #{tpu_custom_call.1} parent=11 // pred_check
          %p380 = pneg %p118
        $region22: #{tpu_custom_call.1} parent=11 // pred_check_branch
          %382 = sbr.rel (%p380) target = $region24
        $region23: #{tpu_custom_call.1} parent=11 // pred_region
          _
        $region24: #{tpu_custom_call.1} parent=11 // pred_fallthru
          _
        // Predicated region
        $region25: #{tpu_custom_call.1} parent=11 // pred_check
          %p383 = pneg %p139
        $region26: #{tpu_custom_call.1} parent=11 // pred_check_branch
          %385 = sbr.rel (%p383) target = $region28
        $region27: #{tpu_custom_call.1} parent=11 // pred_region
          _
        $region28: #{tpu_custom_call.1} parent=11 // pred_fallthru
          _
        // Predicated region
        $region29: #{tpu_custom_call.1} parent=11 // pred_check
          %p386 = pneg %p160
        $region30: #{tpu_custom_call.1} parent=11 // pred_check_branch
          %388 = sbr.rel (%p386) target = $region32
        $region31: #{tpu_custom_call.1} parent=11 // pred_region
          _
        $region32: #{tpu_custom_call.1} parent=11 // pred_fallthru
          _
        // Predicated region
        $region33: #{tpu_custom_call.1} parent=11 // pred_check
          %p389 = pneg %p181
        $region34: #{tpu_custom_call.1} parent=11 // pred_check_branch
          %391 = sbr.rel (%p389) target = $region36
        $region35: #{tpu_custom_call.1} parent=11 // pred_region
          _
        $region36: #{tpu_custom_call.1} parent=11 // pred_fallthru
          _
        // Predicated region
        $region37: #{tpu_custom_call.1} parent=11 // pred_check
          %p392 = pneg %p202
        $region38: #{tpu_custom_call.1} parent=11 // pred_check_branch
          %394 = sbr.rel (%p392) target = $region40
        $region39: #{tpu_custom_call.1} parent=11 // pred_region
          _
        $region40: #{tpu_custom_call.1} parent=11 // pred_fallthru
          _
        // Predicated region
        $region41: #{tpu_custom_call.1} parent=11 // pred_check
          %p395 = pneg %p223
        $region42: #{tpu_custom_call.1} parent=11 // pred_check_branch
          %397 = sbr.rel (%p395) target = $region44
        $region43: #{tpu_custom_call.1} parent=11 // pred_region
          _
        $region44: #{tpu_custom_call.1} parent=11 // pred_fallthru
          _
        // Predicated region
        $region45: #{tpu_custom_call.1} parent=11 // pred_check
          %p398 = pneg %p244
        $region46: #{tpu_custom_call.1} parent=11 // pred_check_branch
          %400 = sbr.rel (%p398) target = $region48
        $region47: #{tpu_custom_call.1} parent=11 // pred_region
          _
        $region48: #{tpu_custom_call.1} parent=11 // pred_fallthru
          _
        // Predicated region
        $region49: #{tpu_custom_call.1} parent=11 // pred_check
          %p401 = pneg %p265
        $region50: #{tpu_custom_call.1} parent=11 // pred_check_branch
          %403 = sbr.rel (%p401) target = $region52
        $region51: #{tpu_custom_call.1} parent=11 // pred_region
          _
        $region52: #{tpu_custom_call.1} parent=11 // pred_fallthru
          _
        // Predicated region
        $region53: #{tpu_custom_call.1} parent=11 // pred_check
          %p404 = pneg %p286
        $region54: #{tpu_custom_call.1} parent=11 // pred_check_branch
          %406 = sbr.rel (%p404) target = $region56
        $region55: #{tpu_custom_call.1} parent=11 // pred_region
          _
        $region56: #{tpu_custom_call.1} parent=11 // pred_fallthru
          _
        // Predicated region
        $region57: #{tpu_custom_call.1} parent=11 // pred_check
          %p407 = pneg %p307
        $region58: #{tpu_custom_call.1} parent=11 // pred_check_branch
          %409 = sbr.rel (%p407) target = $region60
        $region59: #{tpu_custom_call.1} parent=11 // pred_region
          _
        $region60: #{tpu_custom_call.1} parent=11 // pred_fallthru
          _
      $region12: #{tpu_custom_call.1} parent=5 // pred_fallthru
        _
      %p410 = scmp.lt.s32.totalorder %s29, 2
      // Predicated region
      $region61: #{tpu_custom_call.1} parent=5 // pred_check
        %p411 = pneg %p410
      $region62: #{tpu_custom_call.1} parent=5 // pred_check_branch
        %413 = sbr.rel (%p411) target = $region64
      $region63: #{tpu_custom_call.1} parent=5 // pred_region
        // Predicated region
        $region65: #{tpu_custom_call.1} parent=63 // pred_check
          %p414 = pneg %p49
        $region66: #{tpu_custom_call.1} parent=63 // pred_check_branch
          %416 = sbr.rel (%p414) target = $region68
        $region67: #{tpu_custom_call.1} parent=63 // pred_region
          %p417 = scmp.lt.s32.totalorder %s29, 1
          %s418 = scalar_select %p417, %s29, 1
          %s419 = smul.addr %s418, 8
          %s420 = scalar_lea.vmem %s0, %s419
        $region68: #{tpu_custom_call.1} parent=63 // pred_fallthru
          _
      $region64: #{tpu_custom_call.1} parent=5 // pred_fallthru
        _
      %p421 = scmp.le.s32.totalorder 1, %s29
      %p422 = scmp.lt.s32.totalorder %s29, 3
      %p423 = pnand %p421, %p422
      %p424 = pneg %p423
      // Predicated region
      $region69: #{tpu_custom_call.1} parent=5 // pred_check
        _
      $region70: #{tpu_custom_call.1} parent=5 // pred_check_branch
        %426 = sbr.rel (%p423) target = $region72
      $region71: #{tpu_custom_call.1} parent=5 // pred_region
        %s427 = ssub.s32 %s29, 1
        %p428 = scmp.lt.s32.totalorder %s34, 1
        %s429 = scalar_select %p428, %s34, 1
        %s430 = smul.addr %s429, 8
        %s431 = scalar_lea.vmem %s0, %s430
        %p432 = pneg %p55
        %p433 = pneg %p52
        %p434 = pneg %p76
        %p435 = pneg %p73
        %p436 = pneg %p97
        %p437 = pneg %p94
        %p438 = pneg %p118
        %p439 = pneg %p115
        %p440 = pneg %p139
        %p441 = pneg %p136
        %p442 = pneg %p160
        %p443 = pneg %p157
        %p444 = pneg %p181
        %p445 = pneg %p178
        %p446 = pneg %p202
        %p447 = pneg %p199
        %p448 = pneg %p223
        %p449 = pneg %p220
        %p450 = pneg %p244
        %p451 = pneg %p241
        %p452 = pneg %p265
        %p453 = pneg %p262
        %p454 = pneg %p286
        %p455 = pneg %p283
        %p456 = pneg %p307
        %p457 = pneg %p304
        %p458 = pneg %p333
        %p459 = pneg %p330
        %s460 = sand.u32 %s320, 1
        %s461 = scalar_lea.sflag [#allocation6], %s460
        %s462 = sand.u32 %s320, 1
        %s463 = smul.addr %s462, 8
        %s464 = scalar_lea.vmem [#allocation5], %s463
        %p465 = pneg %p359
        %p466 = pneg %p356
        %s467 = sand.u32 %s346, 1
        %s468 = scalar_lea.sflag [#allocation8], %s467
        %s469 = sand.u32 %s346, 1
        %s470 = smul.addr %s469, 8
        %s471 = scalar_lea.vmem [#allocation7], %s470
        %p472 = scmp.lt.s32.totalorder %s34, 1
        %s473 = scalar_select %p472, %s34, 1
        %s474 = smul.addr %s473, 8
        %s475 = scalar_lea.vmem %s0, %s474
        %v476 = vld [vmem:[%s475] sm:$0xff]
        %v477 = vld [vmem:[%s1] sm:$0xff]
        %v478 = vld [vmem:[%s1 + $0x8] sm:$0xff]
        %v479 = vld [vmem:[%s2] sm:$0xff]
        %v480 = vld [vmem:[%s2 + $0x8] sm:$0xff]
        %482 = vset.pattern.permute.xlu0 0
        %483 = vperm.xlu0 %482, %v479
        %v484 = vpop.permute.xlu0 %483
        %487 = vset.pattern.permute.xlu0 0
        %488 = vperm.xlu0 %487, %v480
        %v489 = vpop.permute.xlu0 %488
        %vm491 = vcmask 64512
        %v493 = vsel %vm491, %v477, 0
        %v496 = vsel %vm491, %v478, 0
        %498 = vmatprep.subr.mxu0 0.0
        %499 = vmatpush1.msra.mxu0 %v476
        %500 = vmatprep.subr.mxu0 0.0
        %501 = vmatpush1.msra.mxu0 0.0
        %502 = vmatprep.subr.mxu0 0.0
        %503 = vmatpush1.msra.mxu0 0.0
        %504 = vmatprep.subr.mxu0 0.0
        %505 = vmatpush1.msra.mxu0 0.0
        %506 = vmatprep.subr.mxu0 0.0
        %507 = vmatpush1.msra.mxu0 0.0
        %508 = vmatprep.subr.mxu0 0.0
        %509 = vmatpush1.msra.mxu0 0.0
        %510 = vmatprep.subr.mxu0 0.0
        %511 = vmatpush1.msra.mxu0 0.0
        %512 = vmatprep.subr.mxu0 0.0
        %513 = vmatpush1.msra.mxu0 0.0
        %514 = vmatprep.subr.mxu0 0.0
        %515 = vmatpush1.msra.mxu0 0.0
        %516 = vmatprep.subr.mxu0 0.0
        %517 = vmatpush1.msra.mxu0 0.0
        %518 = vmatprep.subr.mxu0 0.0
        %519 = vmatpush1.msra.mxu0 0.0
        %520 = vmatprep.subr.mxu0 0.0
        %521 = vmatpush1.msra.mxu0 0.0
        %522 = vmatprep.subr.mxu0 0.0
        %523 = vmatpush1.msra.mxu0 0.0
        %524 = vmatprep.subr.mxu0 0.0
        %525 = vmatpush1.msra.mxu0 0.0
        %526 = vmatprep.subr.mxu0 0.0
        %527 = vmatpush1.msra.mxu0 0.0
        %528 = vmatprep.subr.mxu0 0.0
        %529 = vmatpush1.msra.mxu0 0.0
        %530 = vmatprep.subr.mxu0 0.0
        %531 = vmatpush1.msra.mxu0 0.0
        %532 = vmatprep.subr.mxu0 0.0
        %533 = vmatpush1.msra.mxu0 0.0
        %534 = vmatprep.subr.mxu0 0.0
        %535 = vmatpush1.msra.mxu0 0.0
        %536 = vmatprep.subr.mxu0 0.0
        %537 = vmatpush1.msra.mxu0 0.0
        %538 = vmatprep.subr.mxu0 0.0
        %539 = vmatpush1.msra.mxu0 0.0
        %540 = vmatprep.subr.mxu0 0.0
        %541 = vmatpush1.msra.mxu0 0.0
        %542 = vmatprep.subr.mxu0 0.0
        %543 = vmatpush1.msra.mxu0 0.0
        %544 = vmatprep.subr.mxu0 0.0
        %545 = vmatpush1.msra.mxu0 0.0
        %546 = vmatprep.subr.mxu0 0.0
        %547 = vmatpush1.msra.mxu0 0.0
        %548 = vmatprep.subr.mxu0 0.0
        %549 = vmatpush1.msra.mxu0 0.0
        %550 = vmatprep.subr.mxu0 0.0
        %551 = vmatpush1.msra.mxu0 0.0
        %552 = vmatprep.subr.mxu0 0.0
        %553 = vmatpush1.msra.mxu0 0.0
        %554 = vmatprep.subr.mxu0 0.0
        %555 = vmatpush1.msra.mxu0 0.0
        %556 = vmatprep.subr.mxu0 0.0
        %557 = vmatpush1.msra.mxu0 0.0
        %558 = vmatprep.subr.mxu0 0.0
        %559 = vmatpush1.msra.mxu0 0.0
        %560 = vmatprep.subr.mxu0 0.0
        %561 = vmatpush1.msra.mxu0 0.0
        %562 = vmatprep.mubr.f32.mxu0 0.0
        %563 = vmatmul.mubr.f32.gmra.mrb[0].mxu0 %v493
        %v564 = vpop.f32.mrb[0].mxu0
        %v565 = vadd.f32 %v484, %v564
        %v566 = vpop.f32.mrb[0].mxu0
        %567 = vmatprep.mubr.f32.mxu0 0.0
        %568 = vmatmul.mubr.f32.gmra.mrb[0].mxu0 %v496
        %v569 = vpop.f32.mrb[0].mxu0
        %v570 = vadd.f32 %v489, %v569
        %v571 = vpop.f32.mrb[0].mxu0
        %572 = vdwg.mxu0
        %s573 = sld [smem:[#allocation3]]
        %vm574 = vcmp.ge.f32.partialorder %v565, 0.0
        %vm575 = vcmp.ge.f32.partialorder %v570, 0.0
        %v576 = vstv %s573
        %v577 = vmul.f32 %v576, %v565
        %v578 = vmul.f32 %v576, %v570
        %v579 = vsel %vm574, %v565, %v577
        %v580 = vsel %vm575, %v570, %v578
        %v581 = vadd.f32 %v579, %v580
        %582 = vadd.xlane.f32.xlu0 %v581
        %v583 = vpop.xlane.xlu0 %582
        %v584 = vrot.slane %v583, 4
        %v585 = vadd.f32 %v583, %v584
        %v586 = vrot.slane %v585, 2
        %v587 = vadd.f32 %v585, %v586
        %v588 = vrot.slane %v587, 1
        %v589 = vadd.f32 %v587, %v588
        %s590 = vtos %v589
        %v591 = vmul.f32 %v579, %v579
        %v592 = vmul.f32 %v580, %v580
        %v593 = vadd.f32 %v591, %v592
        %594 = vadd.xlane.f32.xlu0 %v593
        %v595 = vpop.xlane.xlu0 %594
        %v596 = vrot.slane %v595, 4
        %v597 = vadd.f32 %v595, %v596
        %v598 = vrot.slane %v597, 2
        %v599 = vadd.f32 %v597, %v598
        %v600 = vrot.slane %v599, 1
        %v601 = vadd.f32 %v599, %v600
        %s602 = vtos %v601
        %s603 = smul.f32 %s590, 0.00048828125
        %s604 = smul.f32 %s602, 0.00048828125
        %s605 = smul.f32 %s603, %s603
        %s606 = ssub.f32 %s604, %s605
        %s607 = sadd.f32 %s606, 1e-08
        %v608 = vstv %s607
        %v609 = vrsqrt.pop %v608
        %s610 = vtos %v609
        %v611 = vld [vmem:[%s3] sm:$0xff]
        %v612 = vld [vmem:[%s3 + $0x8] sm:$0xff]
        %v613 = vstv %s610
        %v614 = vmul.f32 %v613, %v611
        %v615 = vmul.f32 %v613, %v612
        %v616 = vld [vmem:[%s4] sm:$0xff]
        %v617 = vld [vmem:[%s4 + $0x8] sm:$0xff]
        %v618 = vstv %s603
        %v619 = vmul.f32 %v618, %v614
        %v620 = vmul.f32 %v618, %v615
        %v621 = vsub.f32 %v616, %v619
        %v622 = vsub.f32 %v617, %v620
        %624 = vset.pattern.permute.xlu0 0
        %625 = vperm.xlu0 %624, %v614
        %v626 = vpop.permute.xlu0 %625
        %629 = vset.pattern.permute.xlu0 0
        %630 = vperm.xlu0 %629, %v615
        %v631 = vpop.permute.xlu0 %630
        %v633 = vmul.f32 %v579, %v626
        %v634 = vmul.f32 %v580, %v631
        %636 = vset.pattern.permute.xlu0 0
        %637 = vperm.xlu0 %636, %v621
        %v638 = vpop.permute.xlu0 %637
        %641 = vset.pattern.permute.xlu0 0
        %642 = vperm.xlu0 %641, %v622
        %v643 = vpop.permute.xlu0 %642
        %v645 = vadd.f32 %v633, %v638
        %v646 = vadd.f32 %v634, %v643
        %vm647 = vcmask 15360
        %648 = vst.msk [vmem:[#allocation2] sm:$0xff] %vm647, 0.0
        %649 = vst.msk [vmem:[#allocation2 + $0x10] sm:$0xff] %vm647, 0.0
        %vm650 = vcmask 31760
        %651 = vst.msk [vmem:[#allocation2 + $0x8] sm:$0xff] %vm650, 0.0
        %652 = vst.msk [vmem:[#allocation2 + $0x18] sm:$0xff] %vm650, 0.0
        %655 = vrot.lane.b32.xlu0 %v645, 2
        %v656 = vpop.permute.xlu0 %655
        %657 = vrot.lane.b32.xlu0 %v646, 2
        %v658 = vpop.permute.xlu0 %657
        %vm661 = vcmask 1047568
        %662 = vst.msk [vmem:[#allocation2] sm:$0xff] %vm661, %v656
        %663 = vst.msk [vmem:[#allocation2 + $0x8] sm:$0xff] %vm647, %v656
        %664 = vst.msk [vmem:[#allocation2 + $0x10] sm:$0xff] %vm661, %v658
        %665 = vst.msk [vmem:[#allocation2 + $0x18] sm:$0xff] %vm647, %v658
        %v666 = vld [vmem:[%s6] sm:$0xff]
        %v667 = vld [vmem:[%s6 + $0x8] sm:$0xff]
        %v668 = vld [vmem:[%s5] sm:$0xff]
        %v669 = vld [vmem:[%s5 + $0x8] sm:$0xff]
        %v670 = vld [vmem:[#allocation2] sm:$0xff]
        %v671 = vld [vmem:[#allocation2 + $0x10] sm:$0xff]
        %673 = vset.pattern.permute.xlu0 0
        %674 = vperm.xlu0 %673, %v668
        %v675 = vpop.permute.xlu0 %674
        %678 = vset.pattern.permute.xlu0 0
        %679 = vperm.xlu0 %678, %v669
        %v680 = vpop.permute.xlu0 %679
        %v682 = vmul.f32 %v675, %v670
        %v683 = vmul.f32 %v680, %v671
        %685 = vset.pattern.permute.xlu0 0
        %686 = vperm.xlu0 %685, %v666
        %v687 = vpop.permute.xlu0 %686
        %690 = vset.pattern.permute.xlu0 0
        %691 = vperm.xlu0 %690, %v667
        %v692 = vpop.permute.xlu0 %691
        %v694 = vadd.f32 %v687, %v682
        %v695 = vadd.f32 %v692, %v683
        %v696 = vld [vmem:[#allocation2] sm:$0xff]
        %v697 = vld [vmem:[#allocation2 + $0x8] sm:$0xff]
        %v698 = vld [vmem:[#allocation2 + $0x10] sm:$0xff]
        %v699 = vld [vmem:[#allocation2 + $0x18] sm:$0xff]
        %700 = vset.pattern.permute.xlu0 1
        %701 = vperm.xlu0 %700, %v668
        %v702 = vpop.permute.xlu0 %701
        %704 = vset.pattern.permute.xlu0 1
        %705 = vperm.xlu0 %704, %v669
        %v706 = vpop.permute.xlu0 %705
        %v708 = vmul.f32 %v702, %v696
        %v709 = vmul.f32 %v702, %v697
        %v710 = vmul.f32 %v706, %v698
        %v711 = vmul.f32 %v706, %v699
        %716 = vrot.lane.b32.xlu0 %v708, 126
        %v717 = vpop.permute.xlu0 %716
        %718 = vrot.lane.b32.xlu0 %v709, 126
        %v719 = vpop.permute.xlu0 %718
        %720 = vrot.lane.b32.xlu0 %v710, 126
        %v721 = vpop.permute.xlu0 %720
        %722 = vrot.lane.b32.xlu0 %v711, 126
        %v723 = vpop.permute.xlu0 %722
        %vm724 = vcmask 1031168
        %v725 = vsel %vm724, %v717, %v719
        %v726 = vsel %vm724, %v721, %v723
        %v729 = vadd.f32 %v694, %v725
        %v730 = vadd.f32 %v695, %v726
        %731 = vset.pattern.permute.xlu0 2
        %732 = vperm.xlu0 %731, %v668
        %v733 = vpop.permute.xlu0 %732
        %735 = vset.pattern.permute.xlu0 2
        %736 = vperm.xlu0 %735, %v669
        %v737 = vpop.permute.xlu0 %736
        %v739 = vmul.f32 %v733, %v696
        %v740 = vmul.f32 %v733, %v697
        %v741 = vmul.f32 %v737, %v698
        %v742 = vmul.f32 %v737, %v699
        %747 = vrot.lane.b32.xlu0 %v739, 124
        %v748 = vpop.permute.xlu0 %747
        %749 = vrot.lane.b32.xlu0 %v740, 124
        %v750 = vpop.permute.xlu0 %749
        %751 = vrot.lane.b32.xlu0 %v741, 124
        %v752 = vpop.permute.xlu0 %751
        %753 = vrot.lane.b32.xlu0 %v742, 124
        %v754 = vpop.permute.xlu0 %753
        %vm755 = vcmask 1014784
        %v756 = vsel %vm755, %v748, %v750
        %v757 = vsel %vm755, %v752, %v754
        %v760 = vadd.f32 %v729, %v756
        %v761 = vadd.f32 %v730, %v757
        %s762 = sld [smem:[#allocation4]]
        %vm763 = vcmp.ge.f32.partialorder %v760, 0.0
        %vm764 = vcmp.ge.f32.partialorder %v761, 0.0
        %v765 = vstv %s762
        %v766 = vmul.f32 %v765, %v760
        %v767 = vmul.f32 %v765, %v761
        %v768 = vsel %vm763, %v760, %v766
        %v769 = vsel %vm764, %v761, %v767
        %v770 = vadd.f32 %v768, %v769
        %771 = vadd.xlane.f32.xlu0 %v770
        %v772 = vpop.xlane.xlu0 %771
        %v773 = vrot.slane %v772, 4
        %v774 = vadd.f32 %v772, %v773
        %v775 = vrot.slane %v774, 2
        %v776 = vadd.f32 %v774, %v775
        %v777 = vrot.slane %v776, 1
        %v778 = vadd.f32 %v776, %v777
        %s779 = vtos %v778
        %v780 = vmul.f32 %v768, %v768
        %v781 = vmul.f32 %v769, %v769
        %v782 = vadd.f32 %v780, %v781
        %783 = vadd.xlane.f32.xlu0 %v782
        %v784 = vpop.xlane.xlu0 %783
        %v785 = vrot.slane %v784, 4
        %v786 = vadd.f32 %v784, %v785
        %v787 = vrot.slane %v786, 2
        %v788 = vadd.f32 %v786, %v787
        %v789 = vrot.slane %v788, 1
        %v790 = vadd.f32 %v788, %v789
        %s791 = vtos %v790
        %s792 = smul.f32 %s779, 0.00048828125
        %s793 = smul.f32 %s791, 0.00048828125
        %s794 = smul.f32 %s792, %s792
        %s795 = ssub.f32 %s793, %s794
        %s796 = sadd.f32 %s795, 1e-08
        %v797 = vstv %s796
        %v798 = vrsqrt.pop %v797
        %s799 = vtos %v798
        %v800 = vld [vmem:[%s7] sm:$0x1]
        %v801 = vstv %s799
        %v802 = vmul.f32 %v801, %v800
        %v803 = vld [vmem:[%s8] sm:$0x1]
        %v804 = vstv %s792
        %v805 = vmul.f32 %v804, %v802
        %v806 = vsub.f32 %v803, %v805
        %v807 = vld [vmem:[%s9] sm:$0xff]
        %v808 = vld [vmem:[%s9 + $0x8] sm:$0xff]
        %v810 = vlaneseq
        %v811 = vshrl.u32 %v810, 7
        %v812 = vsub.s32 0, %v811
        %v813 = vrot.slane %v802, %v812
        %v815 = vmul.f32 %v807, %v813
        %v816 = vmul.f32 %v808, %v813
        %v817 = vld [vmem:[%s10] sm:$0xff]
        %v818 = vld [vmem:[%s10 + $0x8] sm:$0xff]
        %v820 = vlaneseq
        %v821 = vshrl.u32 %v820, 7
        %v822 = vsub.s32 0, %v821
        %v823 = vrot.slane %v806, %v822
        %v825 = vmul.f32 %v807, %v823
        %v826 = vmul.f32 %v808, %v823
        %vm827 = vcmask 130048
        %v828 = vsel %vm827, %v825, 0.0
        %829 = vadd.xlane.f32.xlu0 %v828
        %v830 = vpop.xlane.xlu0 %829
        %v831 = vsel %vm827, %v826, 0.0
        %832 = vadd.xlane.f32.xlu0 %v831
        %v833 = vpop.xlane.xlu0 %832
        %v834 = vadd.f32 %v817, %v830
        %v835 = vadd.f32 %v818, %v833
        %837 = vset.pattern.permute.xlu0 0
        %838 = vperm.xlu0 %837, %v834
        %v839 = vpop.permute.xlu0 %838
        %842 = vset.pattern.permute.xlu0 0
        %843 = vperm.xlu0 %842, %v835
        %v844 = vpop.permute.xlu0 %843
        %v847 = vsel %vm827, %v815, 0
        %v850 = vsel %vm827, %v816, 0
        %852 = vmatprep.subr.mxu0 0.0
        %853 = vmatpush1.msra.mxu0 %v768
        %854 = vmatprep.subr.mxu0 0.0
        %855 = vmatpush1.msra.mxu0 %v769
        %856 = vmatprep.subr.mxu0 0.0
        %857 = vmatpush1.msra.mxu0 0.0
        %858 = vmatprep.subr.mxu0 0.0
        %859 = vmatpush1.msra.mxu0 0.0
        %860 = vmatprep.subr.mxu0 0.0
        %861 = vmatpush1.msra.mxu0 0.0
        %862 = vmatprep.subr.mxu0 0.0
        %863 = vmatpush1.msra.mxu0 0.0
        %864 = vmatprep.subr.mxu0 0.0
        %865 = vmatpush1.msra.mxu0 0.0
        %866 = vmatprep.subr.mxu0 0.0
        %867 = vmatpush1.msra.mxu0 0.0
        %868 = vmatprep.subr.mxu0 0.0
        %869 = vmatpush1.msra.mxu0 0.0
        %870 = vmatprep.subr.mxu0 0.0
        %871 = vmatpush1.msra.mxu0 0.0
        %872 = vmatprep.subr.mxu0 0.0
        %873 = vmatpush1.msra.mxu0 0.0
        %874 = vmatprep.subr.mxu0 0.0
        %875 = vmatpush1.msra.mxu0 0.0
        %876 = vmatprep.subr.mxu0 0.0
        %877 = vmatpush1.msra.mxu0 0.0
        %878 = vmatprep.subr.mxu0 0.0
        %879 = vmatpush1.msra.mxu0 0.0
        %880 = vmatprep.subr.mxu0 0.0
        %881 = vmatpush1.msra.mxu0 0.0
        %882 = vmatprep.subr.mxu0 0.0
        %883 = vmatpush1.msra.mxu0 0.0
        %884 = vmatprep.subr.mxu0 0.0
        %885 = vmatpush1.msra.mxu0 0.0
        %886 = vmatprep.subr.mxu0 0.0
        %887 = vmatpush1.msra.mxu0 0.0
        %888 = vmatprep.subr.mxu0 0.0
        %889 = vmatpush1.msra.mxu0 0.0
        %890 = vmatprep.subr.mxu0 0.0
        %891 = vmatpush1.msra.mxu0 0.0
        %892 = vmatprep.subr.mxu0 0.0
        %893 = vmatpush1.msra.mxu0 0.0
        %894 = vmatprep.subr.mxu0 0.0
        %895 = vmatpush1.msra.mxu0 0.0
        %896 = vmatprep.subr.mxu0 0.0
        %897 = vmatpush1.msra.mxu0 0.0
        %898 = vmatprep.subr.mxu0 0.0
        %899 = vmatpush1.msra.mxu0 0.0
        %900 = vmatprep.subr.mxu0 0.0
        %901 = vmatpush1.msra.mxu0 0.0
        %902 = vmatprep.subr.mxu0 0.0
        %903 = vmatpush1.msra.mxu0 0.0
        %904 = vmatprep.subr.mxu0 0.0
        %905 = vmatpush1.msra.mxu0 0.0
        %906 = vmatprep.subr.mxu0 0.0
        %907 = vmatpush1.msra.mxu0 0.0
        %908 = vmatprep.subr.mxu0 0.0
        %909 = vmatpush1.msra.mxu0 0.0
        %910 = vmatprep.subr.mxu0 0.0
        %911 = vmatpush1.msra.mxu0 0.0
        %912 = vmatprep.subr.mxu0 0.0
        %913 = vmatpush1.msra.mxu0 0.0
        %914 = vmatprep.subr.mxu0 0.0
        %915 = vmatpush1.msra.mxu0 0.0
        %916 = vmatprep.mubr.f32.mxu0 0.0
        %917 = vmatmul.mubr.f32.gmra.mrb[0].mxu0 %v847
        %v918 = vpop.f32.mrb[0].mxu0
        %v919 = vadd.f32 %v839, %v918
        %v920 = vpop.f32.mrb[0].mxu0
        %921 = vmatprep.mubr.f32.mxu0 0.0
        %922 = vmatmul.mubr.f32.gmra.mrb[0].mxu0 %v850
        %v923 = vpop.f32.mrb[0].mxu0
        %v924 = vadd.f32 %v844, %v923
        %v925 = vpop.f32.mrb[0].mxu0
        %926 = vdwg.mxu0
        %927 = vst [vmem:[%s464] sm:$0xff] %v919
        %928 = vst [vmem:[%s471] sm:$0xff] %v924
        %s929 = sand.u32 %s320, 1
        %s930 = scalar_lea.sflag [#allocation6], %s929
        %s931 = sand.u32 %s320, 1
        %s932 = smul.addr %s931, 8
        %s933 = scalar_lea.vmem [#allocation5], %s932
        %s934 = sand.u32 %s346, 1
        %s935 = scalar_lea.sflag [#allocation8], %s934
        %s936 = sand.u32 %s346, 1
        %s937 = smul.addr %s936, 8
        %s938 = scalar_lea.vmem [#allocation7], %s937
        // Predicated region
        $region73: #{tpu_custom_call.1} parent=71 // pred_check
          %p939 = pneg %p330
        $region74: #{tpu_custom_call.1} parent=71 // pred_check_branch
          %941 = sbr.rel (%p939) target = $region76
        $region75: #{tpu_custom_call.1} parent=71 // pred_region
          %s943 = ssub.s32 128, 128
          %944 = vsyncadd %s930, %s943
          %s945 = smul.addr %s34, 128
          %s946 = scalar_lea.hbm %s13, %s945
          %s948 = sshll.u32 %s933, 4
          %s949 = int_to_ptr.vmem [resolvable:$true] %s948
          %951 = dma.vmem_to_hbm [thread:$0]  %s949, 128, %s946, %s930
        $region76: #{tpu_custom_call.1} parent=71 // pred_fallthru
          _
        // Predicated region
        $region77: #{tpu_custom_call.1} parent=71 // pred_check
          %p952 = pneg %p356
        $region78: #{tpu_custom_call.1} parent=71 // pred_check_branch
          %954 = sbr.rel (%p952) target = $region80
        $region79: #{tpu_custom_call.1} parent=71 // pred_region
          %s956 = ssub.s32 128, 128
          %957 = vsyncadd %s935, %s956
          %s958 = smul.addr %s34, 128
          %s959 = scalar_lea.hbm %s14, %s958
          %s961 = sshll.u32 %s938, 4
          %s962 = int_to_ptr.vmem [resolvable:$true] %s961
          %964 = dma.vmem_to_hbm [thread:$0]  %s962, 128, %s959, %s935
        $region80: #{tpu_custom_call.1} parent=71 // pred_fallthru
          _
      $region72: #{tpu_custom_call.1} parent=5 // pred_fallthru
        _
      %p965 = scmp.le.s32.totalorder 2, %s29
      // Predicated region
      $region81: #{tpu_custom_call.1} parent=5 // pred_check
        %p966 = pneg %p965
      $region82: #{tpu_custom_call.1} parent=5 // pred_check_branch
        %968 = sbr.rel (%p966) target = $region84
      $region83: #{tpu_custom_call.1} parent=5 // pred_region
        %s969 = ssub.s32 %s29, 2
        // Predicated region
        $region85: #{tpu_custom_call.1} parent=83 // pred_check
          %p970 = pneg %p336
        $region86: #{tpu_custom_call.1} parent=83 // pred_check_branch
          %972 = sbr.rel (%p970) target = $region88
        $region87: #{tpu_custom_call.1} parent=83 // pred_region
          %s973 = sand.u32 %s321, 1
          %s974 = scalar_lea.sflag [#allocation6], %s973
          %s975 = sand.u32 %s321, 1
          %s976 = smul.addr %s975, 8
          %s977 = scalar_lea.vmem [#allocation5], %s976
          %978 = dma.done %s974, 128
        $region88: #{tpu_custom_call.1} parent=83 // pred_fallthru
          _
        // Predicated region
        $region89: #{tpu_custom_call.1} parent=83 // pred_check
          %p979 = pneg %p362
        $region90: #{tpu_custom_call.1} parent=83 // pred_check_branch
          %981 = sbr.rel (%p979) target = $region92
        $region91: #{tpu_custom_call.1} parent=83 // pred_region
          %s982 = sand.u32 %s347, 1
          %s983 = scalar_lea.sflag [#allocation8], %s982
          %s984 = sand.u32 %s347, 1
          %s985 = smul.addr %s984, 8
          %s986 = scalar_lea.vmem [#allocation7], %s985
          %987 = dma.done %s983, 128
        $region92: #{tpu_custom_call.1} parent=83 // pred_fallthru
          _
      $region84: #{tpu_custom_call.1} parent=5 // pred_fallthru
        _
    $region6: #{tpu_custom_call.1} parent=1 // loop_footer
      %s33 = sadd.s32 1, %s29
    $region7: #{tpu_custom_call.1} parent=1 // loop_footer_branch
      %28 = sbr.rel target = $region3
    $region8: #{tpu_custom_call.1} parent=1 // loop_exit
      _
    %988 = vsyncpa [#allocation6], 1
    %s989 = scalar_lea.sflag [#allocation6], 1
    %990 = vsyncpa %s989, 1
    %991 = vsyncpa [#allocation8], 1
    %s992 = scalar_lea.sflag [#allocation8], 1
    %993 = vsyncpa %s992, 1

</llo_original>
